<compile_context>
chip_gen: v5e
topology: v5e:2x2
jax: 0.10.0
libtpu: 0.0.40
codegen_flags: <defaults>
</compile_context>

<pallas_src>
import jax
import jax.numpy as jnp
from jax.experimental import pallas as pl
from jax.experimental.pallas import tpu as pltpu


def _round_up(a: int, b: int) -> int:
    return (a + b - 1) // b * b


def _residual_linear_kernel(x_ref, wt_ref, b_ref, xr_ref, o_ref, acc_ref):
    # x_ref : (tm, tk)  -- matmul view of x at block (i, k)
    # wt_ref: (tk, tn)  -- W^T (already transposed in wrapper) at block (k, j)
    # b_ref : (1,  tn)  -- bias at block (0, j)
    # xr_ref: (tm, tn)  -- residual view of x at block (i, j)
    # o_ref : (tm, tn)  -- output at block (i, j)
    # acc_ref: (tm, tn) f32 accumulator, resident across the k axis
    k = pl.program_id(2)

    @pl.when(k == 0)
    def _():
        # Fold the bias into the accumulator exactly once (no per-k broadcast).
        acc_ref[...] = jnp.broadcast_to(
            b_ref[...].astype(jnp.float32), acc_ref.shape
        )

    # MXU matmul, f32 accumulation; weights are already (K, N) -> no transpose.
    acc_ref[...] += jnp.dot(
        x_ref[...], wt_ref[...], preferred_element_type=jnp.float32
    )

    @pl.when(k == pl.num_programs(2) - 1)
    def _():
        # fn(x) + x  (the _Residual wrapper), applied exactly once.
        o_ref[...] = (acc_ref[...] + xr_ref[...]).astype(o_ref.dtype)


def residual_linear(x, w, b, *, tm=256):
    """Compute Linear(x) + x with a tiled, pipelined Pallas kernel.

    x: (N, H)        tokens x features
    w: (H, H)        torch.nn.Linear .weight layout: [out_features, in_features]
    b: (H,)          bias
    """
    n_tok, h = x.shape

    # Lane-dense padded feature dim (multiple of 128); 256-aligned tiles when
    # the padded size allows it (v6e/v7x MXU is 2x256^2), else 128 (v5e-safe).
    hp = _round_up(h, 128)
    tn = 256 if hp % 256 == 0 else 128
    tk = tn

    # Token-axis tile: multiple of 8 (sublane), capped so tiny inputs don't
    # blow up the padded M dimension.
    tm = min(tm, _round_up(n_tok, 8))
    mp = _round_up(n_tok, tm)

    # Pre-transpose W once in the wrapper: (out, in) -> (in, out).
    wt = w.T

    # Zero-pad operands (zero rows/cols contribute nothing to the matmul,
    # bias, or residual; padding is sliced off at the end).
    x_pad = jnp.zeros((mp, hp), x.dtype).at[:n_tok, :h].set(x)
    wt_pad = jnp.zeros((hp, hp), wt.dtype).at[:h, :h].set(wt)
    b_pad = jnp.zeros((1, hp), b.dtype).at[0, :h].set(b)

    grid = (mp // tm, hp // tn, hp // tk)

    cost = pl.CostEstimate(
        flops=2 * mp * hp * hp,
        transcendentals=0,
        bytes_accessed=x.dtype.itemsize * (2 * mp * hp + hp * hp + hp + mp * hp),
    )

    out = pl.pallas_call(
        _residual_linear_kernel,
        out_shape=jax.ShapeDtypeStruct((mp, hp), x.dtype),
        grid_spec=pltpu.PrefetchScalarGridSpec(
            num_scalar_prefetch=0,
            grid=grid,
            in_specs=[
                pl.BlockSpec((tm, tk), lambda i, j, k: (i, k)),   # x (matmul view)
                pl.BlockSpec((tk, tn), lambda i, j, k: (k, j)),   # W^T
                pl.BlockSpec((1, tn), lambda i, j, k: (0, j)),    # bias
                pl.BlockSpec((tm, tn), lambda i, j, k: (i, j)),   # x (residual view)
            ],
            out_specs=pl.BlockSpec((tm, tn), lambda i, j, k: (i, j)),
            scratch_shapes=[pltpu.VMEM((tm, tn), jnp.float32)],
        ),
        compiler_params=pltpu.CompilerParams(
            dimension_semantics=("parallel", "parallel", "arbitrary"),
        ),
        cost_estimate=cost,
    )(x_pad, wt_pad, b_pad, x_pad)

    return out[:n_tok, :h]


if __name__ == "__main__":
    # Small shapes implied by the forward: batch=2, seq=8, hidden=32
    batch, seq, hidden = 2, 8, 32

    key = jax.random.PRNGKey(0)
    kx, kw, kb = jax.random.split(key, 3)

    x = jax.random.normal(kx, (batch, seq, hidden), dtype=jnp.float32)
    # Deterministic synthetic parameters for nn.Linear(hidden, hidden)
    w = jax.random.normal(kw, (hidden, hidden), dtype=jnp.float32) * 0.05
    b = jax.random.normal(kb, (hidden,), dtype=jnp.float32) * 0.05

    # Glue: flatten (batch, seq, H) -> (N, H) tokens for the kernel
    x2d = x.reshape(batch * seq, hidden)

    out2d = residual_linear(x2d, w, b)
    out = out2d.reshape(batch, seq, hidden)
    jax.block_until_ready(out)

    # Reference: fn(x) + x with fn = Linear(W, b), PyTorch semantics y = x W^T + b
    ref = jnp.einsum("bsh,oh->bso", x, w) + b + x
    assert jnp.allclose(out, ref, atol=1e-4, rtol=1e-4), "mismatch vs reference"

    print("KERNEL_OK")
</pallas_src>

<mosaic_0001>
module attributes {stable_mosaic.version = 11 : i64} {
  func.func @_residual_linear_kernel(%arg0: i32, %arg1: i32, %arg2: i32, %arg3: memref<16x128xf32, #tpu.memory_space<vmem>>, %arg4: memref<128x128xf32, #tpu.memory_space<vmem>>, %arg5: memref<1x128xf32, #tpu.memory_space<vmem>>, %arg6: memref<16x128xf32, #tpu.memory_space<vmem>>, %arg7: memref<16x128xf32, #tpu.memory_space<vmem>>, %arg8: memref<16x128xf32, #tpu.memory_space<vmem>>) attributes {dimension_semantics = [#tpu.dimension_semantics<parallel>, #tpu.dimension_semantics<parallel>, #tpu.dimension_semantics<arbitrary>], iteration_bounds = array<i64: 1, 1, 1>, scalar_prefetch = 0 : i64, scratch_operands = 1 : i64, tpu.core_type = #tpu.core_type<tc>, window_params = [{transform_indices = @transform_0, window_bounds = array<i64: 16, 128>}, {transform_indices = @transform_1, window_bounds = array<i64: 128, 128>}, {transform_indices = @transform_2, window_bounds = array<i64: 1, 128>}, {transform_indices = @transform_3, window_bounds = array<i64: 16, 128>}, {transform_indices = @transform_4, window_bounds = array<i64: 16, 128>}]} {
    %c0_i32 = arith.constant 0 : i32
    %0 = arith.cmpi eq, %arg2, %c0_i32 : i32
    %1 = arith.extui %0 : i1 to i32
    %c0_i32_0 = arith.constant 0 : i32
    %2 = arith.cmpi ne, %1, %c0_i32_0 : i32
    scf.if %2 {
      %c0_10 = arith.constant 0 : index
      %c0_11 = arith.constant 0 : index
      %12 = vector.load %arg5[%c0_10, %c0_11] : memref<1x128xf32, #tpu.memory_space<vmem>>, vector<1x128xf32>
      %13 = vector.shape_cast %12 : vector<1x128xf32> to vector<1x128xf32>
      %14 = vector.broadcast %13 : vector<1x128xf32> to vector<16x128xf32>
      %c0_12 = arith.constant 0 : index
      %c0_13 = arith.constant 0 : index
      %15 = vector.load %arg8[%c0_12, %c0_13] : memref<16x128xf32, #tpu.memory_space<vmem>>, vector<16x128xf32>
      tpu.vector_store %arg8[%c0_12, %c0_13], %14 {strides = array<i32>} : memref<16x128xf32, #tpu.memory_space<vmem>>, vector<16x128xf32>,
    } else {
    }
    %c0 = arith.constant 0 : index
    %c0_1 = arith.constant 0 : index
    %3 = vector.load %arg8[%c0, %c0_1] : memref<16x128xf32, #tpu.memory_space<vmem>>, vector<16x128xf32>
    %c0_2 = arith.constant 0 : index
    %c0_3 = arith.constant 0 : index
    %4 = vector.load %arg3[%c0_2, %c0_3] : memref<16x128xf32, #tpu.memory_space<vmem>>, vector<16x128xf32>
    %c0_4 = arith.constant 0 : index
    %c0_5 = arith.constant 0 : index
    %5 = vector.load %arg4[%c0_4, %c0_5] : memref<128x128xf32, #tpu.memory_space<vmem>>, vector<128x128xf32>
    %cst = arith.constant dense<0.000000e+00> : vector<16x128xf32>
    %6 = tpu.matmul %4, %5, %cst {dimension_numbers = #tpu.dot_dimension_numbers<[1], [0], [0], [1], [0, 0, 1, 1], [], []>} : vector<16x128xf32>, vector<128x128xf32>, vector<16x128xf32> -> vector<16x128xf32>
    %7 = arith.addf %3, %6 : vector<16x128xf32>
    %c0_6 = arith.constant 0 : index
    %c0_7 = arith.constant 0 : index
    %8 = vector.load %arg8[%c0_6, %c0_7] : memref<16x128xf32, #tpu.memory_space<vmem>>, vector<16x128xf32>
    tpu.vector_store %arg8[%c0_6, %c0_7], %7 {strides = array<i32>} : memref<16x128xf32, #tpu.memory_space<vmem>>, vector<16x128xf32>,
    %c0_i32_8 = arith.constant 0 : i32
    %9 = arith.cmpi eq, %arg2, %c0_i32_8 : i32
    %10 = arith.extui %9 : i1 to i32
    %c0_i32_9 = arith.constant 0 : i32
    %11 = arith.cmpi ne, %10, %c0_i32_9 : i32
    scf.if %11 {
      %c0_10 = arith.constant 0 : index
      %c0_11 = arith.constant 0 : index
      %12 = vector.load %arg8[%c0_10, %c0_11] : memref<16x128xf32, #tpu.memory_space<vmem>>, vector<16x128xf32>
      %c0_12 = arith.constant 0 : index
      %c0_13 = arith.constant 0 : index
      %13 = vector.load %arg6[%c0_12, %c0_13] : memref<16x128xf32, #tpu.memory_space<vmem>>, vector<16x128xf32>
      %14 = arith.addf %12, %13 : vector<16x128xf32>
      %c0_14 = arith.constant 0 : index
      %c0_15 = arith.constant 0 : index
      %15 = vector.load %arg7[%c0_14, %c0_15] : memref<16x128xf32, #tpu.memory_space<vmem>>, vector<16x128xf32>
      tpu.vector_store %arg7[%c0_14, %c0_15], %14 {strides = array<i32>} : memref<16x128xf32, #tpu.memory_space<vmem>>, vector<16x128xf32>,
    } else {
    }
    return
  }
  func.func @transform_0(%arg0: i32, %arg1: i32, %arg2: i32) -> (i32, i32) {
    %c0_i32 = arith.constant 0 : i32
    return %arg0, %arg2 : i32, i32
  }
  func.func @transform_1(%arg0: i32, %arg1: i32, %arg2: i32) -> (i32, i32) {
    %c0_i32 = arith.constant 0 : i32
    return %arg2, %arg1 : i32, i32
  }
  func.func @transform_2(%arg0: i32, %arg1: i32, %arg2: i32) -> (i32, i32) {
    %c0_i32 = arith.constant 0 : i32
    %c0_i32_0 = arith.constant 0 : i32
    return %c0_i32, %arg1 : i32, i32
  }
  func.func @transform_3(%arg0: i32, %arg1: i32, %arg2: i32) -> (i32, i32) {
    %c0_i32 = arith.constant 0 : i32
    return %arg0, %arg1 : i32, i32
  }
  func.func @transform_4(%arg0: i32, %arg1: i32, %arg2: i32) -> (i32, i32) {
    %c0_i32 = arith.constant 0 : i32
    return %arg0, %arg1 : i32, i32
  }
}

</mosaic_0001>

<llo_original>
// kernel: tpu_custom_call.1
$region0: #{tpu_custom_call.1}
  #allocation0 [shape = 'u32[]', space=smem, size = 0x4, offset = 0x4, fixed_abs, tag = 'smem constant byte address 0x4 - core index']
  #allocation1 [shape = 'u32[72,128]{1,0:T(1,128)}', space=vmem, size = 0x9000, scoped, tag = 'internal scratch']
  #allocation2 [shape = 'f32[16,128]{1,0:T(8,128)}', space=vmem, size = 0x2000, scoped, tag = 'scratch operand']
  %s0 = inlined_call_operand.hbm [shape: f32[16,128], index: 0, kind: input, shape index: {}]
  %s1 = inlined_call_operand.hbm [shape: f32[128,128], index: 1, kind: input, shape index: {}]
  %s2 = inlined_call_operand.vmem [shape: f32[1,128], index: 2, kind: input, shape index: {}]
  %s3 = inlined_call_operand.hbm [shape: f32[16,128], index: 3, kind: input, shape index: {}]
  %s4 = inlined_call_operand.hbm [shape: f32[16,128], index: 4, kind: output, shape index: {}]
  %s5 = sld [smem:[#allocation0]]
  $region46: #{tpu_custom_call.1} parent=0
    _
  %s7 = ssub.s32 1, %s5
  %s8 = scalar_select 0, %s7, %s5
  $region1: #{tpu_custom_call.1} parent=0
    #allocation3 [shape = 'u8[8192]{0}', space=vmem, size = 0x2000, scoped, tag = 'input window, operand 0, single buffered']
    #allocation4 [shape = 's32[1]{0}', space=sflag, size = 0x4, scoped, tag = 'scoped memory for tpu_custom_call.1']
    #allocation5 [shape = 's32[1]{0}', space=sflag, size = 0x4, scoped, tag = 'scoped memory for tpu_custom_call.1']
    #allocation6 [shape = 'u8[65536]{0}', space=vmem, size = 0x10000, scoped, tag = 'input window, operand 1, single buffered']
    #allocation7 [shape = 's32[1]{0}', space=sflag, size = 0x4, scoped, tag = 'scoped memory for tpu_custom_call.1']
    #allocation8 [shape = 'u8[8192]{0}', space=vmem, size = 0x2000, scoped, tag = 'input window, operand 3, single buffered']
    #allocation9 [shape = 'u8[8192]{0}', space=vmem, size = 0x2000, scoped, tag = 'output window, operand 0, single buffered']
    %9 = vsyncpa [#allocation4], 0
    %10 = vsyncpa [#allocation7], 0
    %11 = vsyncpa [#allocation5], 0
    // Predicated region
    $region2: #{tpu_custom_call.1} parent=1 // pred_check
      _
    $region3: #{tpu_custom_call.1} parent=1 // pred_check_branch
      %13 = sbr.rel (0) target = $region5
    $region4: #{tpu_custom_call.1} parent=1 // pred_region
      %15 = vsyncadd [#allocation4], 0
      %s16 = sshll.u32 %s0, 4
      %s17 = int_to_ptr.hbm [resolvable:$true] %s16
      %s18 = sshll.u32 [#allocation3], 4
      %s19 = int_to_ptr.vmem [resolvable:$true] %s18
      %24 = dma.hbm_to_vmem [thread:$0]  %s17, 256, %s19, [#allocation4], 128, 128, 8
    $region5: #{tpu_custom_call.1} parent=1 // pred_fallthru
      _
    // Predicated region
    $region6: #{tpu_custom_call.1} parent=1 // pred_check
      _
    $region7: #{tpu_custom_call.1} parent=1 // pred_check_branch
      %26 = sbr.rel (0) target = $region9
    $region8: #{tpu_custom_call.1} parent=1 // pred_region
      %28 = vsyncadd [#allocation7], 0
      %s29 = sshll.u32 %s1, 4
      %s30 = int_to_ptr.hbm [resolvable:$true] %s29
      %s31 = sshll.u32 [#allocation6], 4
      %s32 = int_to_ptr.vmem [resolvable:$true] %s31
      %37 = dma.hbm_to_vmem [thread:$0]  %s30, 2048, %s32, [#allocation7], 128, 128, 8
    $region9: #{tpu_custom_call.1} parent=1 // pred_fallthru
      _
    // Predicated region
    $region10: #{tpu_custom_call.1} parent=1 // pred_check
      _
    $region11: #{tpu_custom_call.1} parent=1 // pred_check_branch
      %39 = sbr.rel (0) target = $region13
    $region12: #{tpu_custom_call.1} parent=1 // pred_region
      _
    $region13: #{tpu_custom_call.1} parent=1 // pred_fallthru
      _
    // Predicated region
    $region14: #{tpu_custom_call.1} parent=1 // pred_check
      _
    $region15: #{tpu_custom_call.1} parent=1 // pred_check_branch
      %41 = sbr.rel (0) target = $region17
    $region16: #{tpu_custom_call.1} parent=1 // pred_region
      %43 = vsyncadd [#allocation7], 0
      %s44 = sshll.u32 %s3, 4
      %s45 = int_to_ptr.hbm [resolvable:$true] %s44
      %s46 = sshll.u32 [#allocation8], 4
      %s47 = int_to_ptr.vmem [resolvable:$true] %s46
      %52 = dma.hbm_to_vmem [thread:$0]  %s45, 256, %s47, [#allocation7], 128, 128, 8
    $region17: #{tpu_custom_call.1} parent=1 // pred_fallthru
      _
    // Predicated region
    $region18: #{tpu_custom_call.1} parent=1 // pred_check
      _
    $region19: #{tpu_custom_call.1} parent=1 // pred_check_branch
      %54 = sbr.rel (0) target = $region21
    $region20: #{tpu_custom_call.1} parent=1 // pred_region
      %56 = dma.done [#allocation4], 256
    $region21: #{tpu_custom_call.1} parent=1 // pred_fallthru
      _
    // Predicated region
    $region22: #{tpu_custom_call.1} parent=1 // pred_check
      _
    $region23: #{tpu_custom_call.1} parent=1 // pred_check_branch
      %58 = sbr.rel (0) target = $region25
    $region24: #{tpu_custom_call.1} parent=1 // pred_region
      %60 = dma.done [#allocation7], 2048
    $region25: #{tpu_custom_call.1} parent=1 // pred_fallthru
      _
    // Predicated region
    $region26: #{tpu_custom_call.1} parent=1 // pred_check
      _
    $region27: #{tpu_custom_call.1} parent=1 // pred_check_branch
      %62 = sbr.rel (0) target = $region29
    $region28: #{tpu_custom_call.1} parent=1 // pred_region
      %64 = dma.done [#allocation7], 256
    $region29: #{tpu_custom_call.1} parent=1 // pred_fallthru
      _
    %p65 = scmp.eq.s32.totalorder 0, 0
    // Predicated region
    $region30: #{tpu_custom_call.1} parent=1 // pred_check
      %p66 = pneg %p65
    $region31: #{tpu_custom_call.1} parent=1 // pred_check_branch
      %68 = sbr.rel (%p66) target = $region33
    $region32: #{tpu_custom_call.1} parent=1 // pred_region
      %v69 = vld [vmem:[%s2] sm:$0x1]
      %v71 = vperm.slane %v69, 0
      %73 = vst [vmem:[#allocation2] sm:$0xff] %v71
      %74 = vst [vmem:[#allocation2 + $0x8] sm:$0xff] %v71
    $region33: #{tpu_custom_call.1} parent=1 // pred_fallthru
      _
    %v75 = vld [vmem:[#allocation2] sm:$0xff]
    %v76 = vld [vmem:[#allocation2 + $0x8] sm:$0xff]
    %v77 = vld [vmem:[#allocation3] sm:$0xff]
    %v78 = vld [vmem:[#allocation3 + $0x8] sm:$0xff]
    %v79 = vld [vmem:[#allocation6] sm:$0xff]
    %v80 = vld [vmem:[#allocation6 + $0x8] sm:$0xff]
    %v81 = vld [vmem:[#allocation6 + $0x10] sm:$0xff]
    %v82 = vld [vmem:[#allocation6 + $0x18] sm:$0xff]
    %v83 = vld [vmem:[#allocation6 + $0x20] sm:$0xff]
    %v84 = vld [vmem:[#allocation6 + $0x28] sm:$0xff]
    %v85 = vld [vmem:[#allocation6 + $0x30] sm:$0xff]
    %v86 = vld [vmem:[#allocation6 + $0x38] sm:$0xff]
    %v87 = vld [vmem:[#allocation6 + $0x40] sm:$0xff]
    %v88 = vld [vmem:[#allocation6 + $0x48] sm:$0xff]
    %v89 = vld [vmem:[#allocation6 + $0x50] sm:$0xff]
    %v90 = vld [vmem:[#allocation6 + $0x58] sm:$0xff]
    %v91 = vld [vmem:[#allocation6 + $0x60] sm:$0xff]
    %v92 = vld [vmem:[#allocation6 + $0x68] sm:$0xff]
    %v93 = vld [vmem:[#allocation6 + $0x70] sm:$0xff]
    %v94 = vld [vmem:[#allocation6 + $0x78] sm:$0xff]
    %95 = vmatpush.msra.mxu0 %v94
    %96 = vmatpush.msra.mxu0 %v93
    %97 = vmatpush.msra.mxu0 %v92
    %98 = vmatpush.msra.mxu0 %v91
    %99 = vmatpush.msra.mxu0 %v90
    %100 = vmatpush.msra.mxu0 %v89
    %101 = vmatpush.msra.mxu0 %v88
    %102 = vmatpush.msra.mxu0 %v87
    %103 = vmatpush.msra.mxu0 %v86
    %104 = vmatpush.msra.mxu0 %v85
    %105 = vmatpush.msra.mxu0 %v84
    %106 = vmatpush.msra.mxu0 %v83
    %107 = vmatpush.msra.mxu0 %v82
    %108 = vmatpush.msra.mxu0 %v81
    %109 = vmatpush.msra.mxu0 %v80
    %110 = vmatpush.msra.mxu0 %v79
    %111 = vmatmul.f32.gmra.mxu0 %v77
    %v112 = vpop.f32.mrf.mxu0
    %v113 = vadd.f32 0.0, %v112
    %114 = vmatmul.f32.gmra.mxu0 %v78
    %v115 = vpop.f32.mrf.mxu0
    %v116 = vadd.f32 0.0, %v115
    %117 = vdwg.mxu0
    %v118 = vadd.f32 %v75, %v113
    %v119 = vadd.f32 %v76, %v116
    %120 = vst [vmem:[#allocation2] sm:$0xff] %v118
    %121 = vst [vmem:[#allocation2 + $0x8] sm:$0xff] %v119
    // Predicated region
    $region34: #{tpu_custom_call.1} parent=1 // pred_check
      %p122 = pneg %p65
    $region35: #{tpu_custom_call.1} parent=1 // pred_check_branch
      %124 = sbr.rel (%p122) target = $region37
    $region36: #{tpu_custom_call.1} parent=1 // pred_region
      %v125 = vld [vmem:[#allocation2] sm:$0xff]
      %v126 = vld [vmem:[#allocation2 + $0x8] sm:$0xff]
      %v127 = vld [vmem:[#allocation8] sm:$0xff]
      %v128 = vld [vmem:[#allocation8 + $0x8] sm:$0xff]
      %v129 = vadd.f32 %v125, %v127
      %v130 = vadd.f32 %v126, %v128
      %131 = vst [vmem:[#allocation9] sm:$0xff] %v129
      %132 = vst [vmem:[#allocation9 + $0x8] sm:$0xff] %v130
    $region37: #{tpu_custom_call.1} parent=1 // pred_fallthru
      _
    // Predicated region
    $region38: #{tpu_custom_call.1} parent=1 // pred_check
      _
    $region39: #{tpu_custom_call.1} parent=1 // pred_check_branch
      %134 = sbr.rel (0) target = $region41
    $region40: #{tpu_custom_call.1} parent=1 // pred_region
      %136 = vsyncadd [#allocation5], 0
      %s137 = sshll.u32 [#allocation9], 4
      %s138 = int_to_ptr.vmem [resolvable:$true] %s137
      %s139 = sshll.u32 %s4, 4
      %s140 = int_to_ptr.hbm [resolvable:$true] %s139
      %145 = dma.vmem_to_hbm [thread:$0]  %s138, 256, %s140, [#allocation5], 128, 128, 8
    $region41: #{tpu_custom_call.1} parent=1 // pred_fallthru
      _
    // Predicated region
    $region42: #{tpu_custom_call.1} parent=1 // pred_check
      _
    $region43: #{tpu_custom_call.1} parent=1 // pred_check_branch
      %147 = sbr.rel (0) target = $region45
    $region44: #{tpu_custom_call.1} parent=1 // pred_region
      %149 = dma.done [#allocation5], 256
    $region45: #{tpu_custom_call.1} parent=1 // pred_fallthru
      _
    %150 = vsyncpa [#allocation4], 1
    %151 = vsyncpa [#allocation7], 1
    %152 = vsyncpa [#allocation5], 1

</llo_original>
